<compile_context>
chip_gen: v5e
topology: v5e:2x2
jax: 0.10.0
libtpu: 0.0.40
codegen_flags: <defaults>
</compile_context>

<pallas_src>
import functools

import jax
import jax.numpy as jnp
import numpy as np
from jax.experimental import pallas as pl
from jax.experimental.pallas import tpu as pltpu

# Default LIFRefracParameters (norse):
TAU_SYN_INV = 1.0 / 5e-3   # 200.0
TAU_MEM_INV = 1.0 / 1e-2   # 100.0
V_LEAK = 0.0
V_TH = 1.0
V_RESET = 0.0
RHO_RESET = 5.0
DT = 0.001

_MIB = 1024 * 1024
_LANE = 128


def _round_up(x: int, m: int) -> int:
    return (x + m - 1) // m * m


def _vmem_capacity_bytes() -> int:
    try:
        return int(pltpu.get_tpu_info().vmem_capacity_bytes)
    except Exception:
        return 64 * _MIB  # conservative: v7x per-TensorCore VMEM


def _pick_batch_tile(batch: int, vmem_cap: int) -> int:
    """Rows per batch-grid step.  Aim for >=4 tiles (keeps v7x's 2 TensorCores busy
    and gives the DMA pipeline something to overlap); larger cap on 128 MiB parts."""
    cap = 256 if vmem_cap <= 64 * _MIB else 1024
    if batch <= 8:
        return batch
    tb = _round_up(pl.cdiv(batch, 4), 8)
    return int(max(8, min(cap, tb)))


def _lif_mc_refrac_seq_kernel(x_ref, z0_ref, v0_ref, i0_ref, rho0_ref,
                              w_in_ref, w_rec_ref, g_ref,
                              zs_ref, z_ref, v_ref, i_ref, rho_ref):
    t = pl.program_id(1)

    # t == 0: load the carried-in state for this batch tile into the VMEM-resident
    # state output blocks; they act as the recurrent carry across the time axis.
    @pl.when(t == 0)
    def _():
        z_ref[...] = z0_ref[...]
        v_ref[...] = v0_ref[...]
        i_ref[...] = i0_ref[...]
        rho_ref[...] = rho0_ref[...]

    z = z_ref[...]
    v = v_ref[...]
    i = i_ref[...]
    rho = rho_ref[...]

    # --- multi-compartment LIF dynamics (lif_mc_step) ----------------------
    # compartment coupling: v @ g_coupling.T == v @ g_t (pre-transposed on host)
    couple = jnp.dot(v, g_ref[...], preferred_element_type=jnp.float32)
    dv = DT * TAU_MEM_INV * ((V_LEAK - v) + i) + couple
    v_decayed = v + dv
    i_decayed = i - DT * TAU_SYN_INV * i

    spike = (v_decayed - V_TH) > 0.0          # heaviside forward of "super" threshold
    refrac = rho > 0.0

    # current jumps: input + recurrent projections (two MXU passes; MXU has slack)
    i_new = (i_decayed
             + jnp.dot(x_ref[...], w_in_ref[...], preferred_element_type=jnp.float32)
             + jnp.dot(z, w_rec_ref[...], preferred_element_type=jnp.float32))

    # --- refractory update (compute_refractory_update) ---------------------
    fired = jnp.logical_and(spike, jnp.logical_not(refrac))
    v_new = jnp.where(spike, V_RESET, v_decayed)
    v_out = jnp.where(refrac, v, v_new)
    z_out = fired.astype(jnp.float32)
    rho_decay = jnp.maximum(rho - refrac.astype(jnp.float32), 0.0)
    rho_new = jnp.where(fired, RHO_RESET, rho_decay)

    zs_ref[...] = z_out       # spike train output for this timestep
    z_ref[...] = z_out        # carry for next timestep
    v_ref[...] = v_out
    i_ref[...] = i_new
    rho_ref[...] = rho_new


def prepare_weights(w_in, w_rec, g_coupling):
    """Transpose + zero-pad the projection weights ONCE on the host.

    Hidden (lane) dims are padded to a multiple of 128 so every state tensor and
    output store is lane-dense (unmasked vst) and MXU result tiles are full.
    Padded rows/cols are zero -> padded state stays identically zero (no semantic
    change).  Returns (w_in_t (I, Hp), w_rec_t (Hp, Hp), g_t (Hp, Hp)).
    """
    hidden, in_size = w_in.shape
    h_pad = max(_LANE, _round_up(hidden, _LANE))
    w_in_t = jnp.zeros((in_size, h_pad), jnp.float32).at[:, :hidden].set(
        jnp.transpose(w_in).astype(jnp.float32))
    w_rec_t = jnp.zeros((h_pad, h_pad), jnp.float32).at[:hidden, :hidden].set(
        jnp.transpose(w_rec).astype(jnp.float32))
    g_t = jnp.zeros((h_pad, h_pad), jnp.float32).at[:hidden, :hidden].set(
        jnp.transpose(g_coupling).astype(jnp.float32))
    return w_in_t, w_rec_t, g_t


def _build_seq_call(seq_len, batch, in_size, h_pad, tb, vmem_cap):
    nb = pl.cdiv(batch, tb)
    grid = (nb, seq_len)

    x_spec = pl.BlockSpec((None, tb, in_size), lambda b, t: (t, b, 0))
    st_in_spec = pl.BlockSpec((tb, h_pad), lambda b, t: (b, 0))
    # Weights: constant index map -> fetched once, VMEM-resident for the whole grid.
    # TODO(synk): for very large hidden (f32 weights approaching VMEM capacity),
    # single-buffer these via pipeline_mode=pl.Buffered(1), store them in bf16
    # (keep f32 accumulation), and/or add a grid axis tiling the hidden/N columns
    # (and drop the state input_output_aliases in that variant to avoid the
    # cross-N-tile read-after-write hazard on v).
    w_in_spec = pl.BlockSpec((in_size, h_pad), lambda b, t: (0, 0))
    w_spec = pl.BlockSpec((h_pad, h_pad), lambda b, t: (0, 0))

    zs_spec = pl.BlockSpec((None, tb, h_pad), lambda b, t: (t, b, 0))
    st_out_spec = pl.BlockSpec((tb, h_pad), lambda b, t: (b, 0))

    out_shape = (jax.ShapeDtypeStruct((seq_len, batch, h_pad), jnp.float32),) + tuple(
        jax.ShapeDtypeStruct((batch, h_pad), jnp.float32) for _ in range(4))

    # VMEM budget: weights + double-buffered streamed blocks + resident state blocks,
    # with headroom below physical capacity (v7x has only 64 MiB per TensorCore).
    weight_bytes = (in_size * h_pad + 2 * h_pad * h_pad) * 4
    stream_bytes = 2 * (tb * in_size + tb * h_pad) * 4          # x in + z_seq out (x2 bufs)
    state_bytes = 8 * 2 * tb * h_pad * 4                        # 4 state in + 4 carry out
    needed = 2 * weight_bytes + stream_bytes + state_bytes + 2 * _MIB
    vmem_limit = int(min(int(0.75 * vmem_cap), max(32 * _MIB, needed)))

    flops_step = 2 * batch * h_pad * (in_size + 2 * h_pad) + 14 * batch * h_pad
    cost = pl.CostEstimate(
        flops=int(seq_len * flops_step),
        transcendentals=0,
        bytes_accessed=int(4 * (seq_len * batch * (in_size + h_pad)      # x in, z_seq out
                                + 9 * batch * h_pad                      # state in/out (once)
                                + in_size * h_pad + 2 * h_pad * h_pad)), # weights (once)
    )

    return pl.pallas_call(
        _lif_mc_refrac_seq_kernel,
        out_shape=out_shape,
        grid=grid,
        in_specs=[x_spec, st_in_spec, st_in_spec, st_in_spec, st_in_spec,
                  w_in_spec, w_spec, w_spec],
        out_specs=(zs_spec, st_out_spec, st_out_spec, st_out_spec, st_out_spec),
        # Recurrent carry: reuse the state input HBM buffers for the final state.
        input_output_aliases={1: 1, 2: 2, 3: 3, 4: 4},
        compiler_params=pltpu.CompilerParams(
            dimension_semantics=("parallel", "arbitrary"),
            vmem_limit_bytes=vmem_limit,
        ),
        cost_estimate=cost,
    )


@jax.jit
def lif_mc_refrac_sequence(x_seq, z0, v0, i0, rho0, w_in_t, w_rec_t, g_t):
    """Run T LIFMCRefracCell steps with the recurrent state resident in VMEM.

    x_seq:            (T, B, input_size)
    z0/v0/i0/rho0:    (B, hidden_size) carried state (unpadded)
    w_in_t/w_rec_t/g_t: from prepare_weights (hidden padded to a multiple of 128)
    Returns (z_seq (T,B,hidden), (z, v, i, rho) final state), unpadded.
    """
    seq_len, batch, in_size = x_seq.shape
    hidden = z0.shape[1]
    h_pad = g_t.shape[0]
    vmem_cap = _vmem_capacity_bytes()
    tb = _pick_batch_tile(batch, vmem_cap)

    def pad_state(s):
        s = s.astype(jnp.float32)
        if s.shape[1] == h_pad:
            return s
        return jnp.pad(s, ((0, 0), (0, h_pad - s.shape[1])))

    call = _build_seq_call(seq_len, batch, in_size, h_pad, tb, vmem_cap)
    z_seq, z_f, v_f, i_f, rho_f = call(
        x_seq.astype(jnp.float32),
        pad_state(z0), pad_state(v0), pad_state(i0), pad_state(rho0),
        w_in_t, w_rec_t, g_t)

    z_seq = z_seq[:, :, :hidden]
    state = tuple(s[:, :hidden] for s in (z_f, v_f, i_f, rho_f))
    return z_seq, state


def lif_mc_refrac_cell(x, z, v, i, rho, w_in_t, w_rec_t, g_t):
    """One LIFMCRefracCell.forward step (module semantics): (z_out, (z, v, i, rho))."""
    z_seq, state = lif_mc_refrac_sequence(x[None], z, v, i, rho, w_in_t, w_rec_t, g_t)
    return z_seq[0], state


def _reference_step(x, z, v, i, rho, w_in, w_rec, g):
    dv = DT * TAU_MEM_INV * ((V_LEAK - v) + i) + v @ g.T
    v_dec = v + dv
    i_dec = i - DT * TAU_SYN_INV * i
    z_new = (v_dec - V_TH > 0.0).astype(jnp.float32)
    v_new = (1.0 - z_new) * v_dec + z_new * V_RESET
    i_new = i_dec + x @ w_in.T + z @ w_rec.T
    refrac = (rho > 0.0).astype(jnp.float32)
    v_out = (1.0 - refrac) * v_new + refrac * v
    z_out = (1.0 - refrac) * z_new
    rho_new = (1.0 - z_out) * jnp.maximum(rho - refrac, 0.0) + z_out * RHO_RESET
    return z_out, v_out, i_new, rho_new


if __name__ == "__main__":
    batch, input_size, hidden_size, seq_len = 2, 16, 32, 8

    key = jax.random.PRNGKey(0)
    ks = jax.random.split(key, 7)

    # Deterministic parameter init matching torch.randn(...) / sqrt(fan_in) shapes.
    w_in = jax.random.normal(ks[0], (hidden_size, input_size), jnp.float32) / np.sqrt(input_size)
    w_rec = jax.random.normal(ks[1], (hidden_size, hidden_size), jnp.float32) / np.sqrt(hidden_size)
    g_coupling = jax.random.normal(ks[2], (hidden_size, hidden_size), jnp.float32) / np.sqrt(hidden_size)

    # Inputs + a non-trivial state (initial_state() would be all zeros).
    x_seq = jax.random.normal(ks[3], (seq_len, batch, input_size), jnp.float32)
    z0 = jnp.zeros((batch, hidden_size), jnp.float32)
    v0 = jax.random.normal(ks[4], (batch, hidden_size), jnp.float32)
    i0 = jax.random.normal(ks[5], (batch, hidden_size), jnp.float32)
    rho0 = jnp.maximum(jax.random.normal(ks[6], (batch, hidden_size), jnp.float32), 0.0)

    # Transpose / pad the weights once (outside the per-sequence call).
    w_in_t, w_rec_t, g_t = prepare_weights(w_in, w_rec, g_coupling)

    # --- single step (== module forward) ---------------------------------
    z_out, (z_s, v_s, i_s, rho_s) = lif_mc_refrac_cell(
        x_seq[0], z0, v0, i0, rho0, w_in_t, w_rec_t, g_t)
    jax.block_until_ready((z_out, z_s, v_s, i_s, rho_s))

    ref = _reference_step(x_seq[0], z0, v0, i0, rho0, w_in, w_rec, g_coupling)
    np.testing.assert_allclose(np.asarray(z_out), np.asarray(ref[0]), rtol=1e-5, atol=1e-4)
    for got, want in zip((z_s, v_s, i_s, rho_s), ref):
        np.testing.assert_allclose(np.asarray(got), np.asarray(want), rtol=1e-5, atol=1e-4)

    # --- fused multi-timestep sequence (state stays in VMEM) --------------
    z_seq, (z_T, v_T, i_T, rho_T) = lif_mc_refrac_sequence(
        x_seq, z0, v0, i0, rho0, w_in_t, w_rec_t, g_t)
    jax.block_until_ready((z_seq, z_T, v_T, i_T, rho_T))

    z_r, v_r, i_r, rho_r = z0, v0, i0, rho0
    z_seq_ref = []
    for t in range(seq_len):
        z_r, v_r, i_r, rho_r = _reference_step(x_seq[t], z_r, v_r, i_r, rho_r,
                                               w_in, w_rec, g_coupling)
        z_seq_ref.append(z_r)
    z_seq_ref = jnp.stack(z_seq_ref)

    np.testing.assert_allclose(np.asarray(z_seq), np.asarray(z_seq_ref), rtol=1e-5, atol=1e-4)
    for got, want in zip((z_T, v_T, i_T, rho_T), (z_r, v_r, i_r, rho_r)):
        np.testing.assert_allclose(np.asarray(got), np.asarray(want), rtol=1e-5, atol=1e-4)

    print("KERNEL_OK")
</pallas_src>

<mosaic_0001>
module attributes {stable_mosaic.version = 11 : i64} {
  func.func @_lif_mc_refrac_seq_kernel(%arg0: i32, %arg1: i32, %arg2: memref<1x2x16xf32, #tpu.memory_space<vmem>>, %arg3: memref<2x128xf32, #tpu.memory_space<vmem>>, %arg4: memref<2x128xf32, #tpu.memory_space<vmem>>, %arg5: memref<2x128xf32, #tpu.memory_space<vmem>>, %arg6: memref<2x128xf32, #tpu.memory_space<vmem>>, %arg7: memref<16x128xf32, #tpu.memory_space<vmem>>, %arg8: memref<128x128xf32, #tpu.memory_space<vmem>>, %arg9: memref<128x128xf32, #tpu.memory_space<vmem>>, %arg10: memref<1x2x128xf32, #tpu.memory_space<vmem>>, %arg11: memref<2x128xf32, #tpu.memory_space<vmem>>, %arg12: memref<2x128xf32, #tpu.memory_space<vmem>>, %arg13: memref<2x128xf32, #tpu.memory_space<vmem>>, %arg14: memref<2x128xf32, #tpu.memory_space<vmem>>) attributes {dimension_semantics = [#tpu.dimension_semantics<parallel>, #tpu.dimension_semantics<arbitrary>], iteration_bounds = array<i64: 1, 1>, scalar_prefetch = 0 : i64, scratch_operands = 0 : i64, tpu.core_type = #tpu.core_type<tc>, window_params = [{transform_indices = @transform_0, window_bounds = array<i64: 1, 2, 16>}, {transform_indices = @transform_1, window_bounds = array<i64: 2, 128>}, {transform_indices = @transform_2, window_bounds = array<i64: 2, 128>}, {transform_indices = @transform_3, window_bounds = array<i64: 2, 128>}, {transform_indices = @transform_4, window_bounds = array<i64: 2, 128>}, {pipeline_mode = #tpu.pipeline_mode<synchronous>, transform_indices = @transform_5, window_bounds = array<i64: 16, 128>}, {pipeline_mode = #tpu.pipeline_mode<synchronous>, transform_indices = @transform_6, window_bounds = array<i64: 128, 128>}, {pipeline_mode = #tpu.pipeline_mode<synchronous>, transform_indices = @transform_7, window_bounds = array<i64: 128, 128>}, {transform_indices = @transform_8, window_bounds = array<i64: 1, 2, 128>}, {transform_indices = @transform_9, window_bounds = array<i64: 2, 128>}, {transform_indices = @transform_10, window_bounds = array<i64: 2, 128>}, {transform_indices = @transform_11, window_bounds = array<i64: 2, 128>}, {transform_indices = @transform_12, window_bounds = array<i64: 2, 128>}]} {
    %c0_i32 = arith.constant 0 : i32
    %0 = arith.cmpi eq, %arg1, %c0_i32 : i32
    %1 = arith.extui %0 : i1 to i32
    %c0_i32_0 = arith.constant 0 : i32
    %2 = arith.cmpi ne, %1, %c0_i32_0 : i32
    scf.if %2 {
      %c0_40 = arith.constant 0 : index
      %c0_41 = arith.constant 0 : index
      %54 = vector.load %arg3[%c0_40, %c0_41] : memref<2x128xf32, #tpu.memory_space<vmem>>, vector<2x128xf32>
      %c0_42 = arith.constant 0 : index
      %c0_43 = arith.constant 0 : index
      %55 = vector.load %arg11[%c0_42, %c0_43] : memref<2x128xf32, #tpu.memory_space<vmem>>, vector<2x128xf32>
      tpu.vector_store %arg11[%c0_42, %c0_43], %54 {strides = array<i32>} : memref<2x128xf32, #tpu.memory_space<vmem>>, vector<2x128xf32>,
      %c0_44 = arith.constant 0 : index
      %c0_45 = arith.constant 0 : index
      %56 = vector.load %arg4[%c0_44, %c0_45] : memref<2x128xf32, #tpu.memory_space<vmem>>, vector<2x128xf32>
      %c0_46 = arith.constant 0 : index
      %c0_47 = arith.constant 0 : index
      %57 = vector.load %arg12[%c0_46, %c0_47] : memref<2x128xf32, #tpu.memory_space<vmem>>, vector<2x128xf32>
      tpu.vector_store %arg12[%c0_46, %c0_47], %56 {strides = array<i32>} : memref<2x128xf32, #tpu.memory_space<vmem>>, vector<2x128xf32>,
      %c0_48 = arith.constant 0 : index
      %c0_49 = arith.constant 0 : index
      %58 = vector.load %arg5[%c0_48, %c0_49] : memref<2x128xf32, #tpu.memory_space<vmem>>, vector<2x128xf32>
      %c0_50 = arith.constant 0 : index
      %c0_51 = arith.constant 0 : index
      %59 = vector.load %arg13[%c0_50, %c0_51] : memref<2x128xf32, #tpu.memory_space<vmem>>, vector<2x128xf32>
      tpu.vector_store %arg13[%c0_50, %c0_51], %58 {strides = array<i32>} : memref<2x128xf32, #tpu.memory_space<vmem>>, vector<2x128xf32>,
      %c0_52 = arith.constant 0 : index
      %c0_53 = arith.constant 0 : index
      %60 = vector.load %arg6[%c0_52, %c0_53] : memref<2x128xf32, #tpu.memory_space<vmem>>, vector<2x128xf32>
      %c0_54 = arith.constant 0 : index
      %c0_55 = arith.constant 0 : index
      %61 = vector.load %arg14[%c0_54, %c0_55] : memref<2x128xf32, #tpu.memory_space<vmem>>, vector<2x128xf32>
      tpu.vector_store %arg14[%c0_54, %c0_55], %60 {strides = array<i32>} : memref<2x128xf32, #tpu.memory_space<vmem>>, vector<2x128xf32>,
    } else {
    }
    %c0 = arith.constant 0 : index
    %c0_1 = arith.constant 0 : index
    %3 = vector.load %arg11[%c0, %c0_1] : memref<2x128xf32, #tpu.memory_space<vmem>>, vector<2x128xf32>
    %c0_2 = arith.constant 0 : index
    %c0_3 = arith.constant 0 : index
    %4 = vector.load %arg12[%c0_2, %c0_3] : memref<2x128xf32, #tpu.memory_space<vmem>>, vector<2x128xf32>
    %c0_4 = arith.constant 0 : index
    %c0_5 = arith.constant 0 : index
    %5 = vector.load %arg13[%c0_4, %c0_5] : memref<2x128xf32, #tpu.memory_space<vmem>>, vector<2x128xf32>
    %c0_6 = arith.constant 0 : index
    %c0_7 = arith.constant 0 : index
    %6 = vector.load %arg14[%c0_6, %c0_7] : memref<2x128xf32, #tpu.memory_space<vmem>>, vector<2x128xf32>
    %c0_8 = arith.constant 0 : index
    %c0_9 = arith.constant 0 : index
    %7 = vector.load %arg9[%c0_8, %c0_9] : memref<128x128xf32, #tpu.memory_space<vmem>>, vector<128x128xf32>
    %cst = arith.constant dense<0.000000e+00> : vector<2x128xf32>
    %8 = tpu.matmul %4, %7, %cst {dimension_numbers = #tpu.dot_dimension_numbers<[1], [0], [0], [1], [0, 0, 1, 1], [], []>} : vector<2x128xf32>, vector<128x128xf32>, vector<2x128xf32> -> vector<2x128xf32>
    %cst_10 = arith.constant 0.000000e+00 : f32
    %9 = vector.broadcast %cst_10 : f32 to vector<2x128xf32>
    %10 = arith.subf %9, %4 : vector<2x128xf32>
    %11 = arith.addf %10, %5 : vector<2x128xf32>
    %cst_11 = arith.constant 1.000000e-01 : f32
    %12 = vector.broadcast %cst_11 : f32 to vector<2x128xf32>
    %13 = arith.mulf %12, %11 : vector<2x128xf32>
    %14 = arith.addf %13, %8 : vector<2x128xf32>
    %15 = arith.addf %4, %14 : vector<2x128xf32>
    %cst_12 = arith.constant 2.000000e-01 : f32
    %16 = vector.broadcast %cst_12 : f32 to vector<2x128xf32>
    %17 = arith.mulf %16, %5 : vector<2x128xf32>
    %18 = arith.subf %5, %17 : vector<2x128xf32>
    %cst_13 = arith.constant 1.000000e+00 : f32
    %19 = vector.broadcast %cst_13 : f32 to vector<2x128xf32>
    %20 = arith.subf %15, %19 : vector<2x128xf32>
    %cst_14 = arith.constant 0.000000e+00 : f32
    %21 = vector.broadcast %cst_14 : f32 to vector<2x128xf32>
    %22 = arith.cmpf ogt, %20, %21 : vector<2x128xf32>
    %cst_15 = arith.constant 0.000000e+00 : f32
    %23 = vector.broadcast %cst_15 : f32 to vector<2x128xf32>
    %24 = arith.cmpf ogt, %6, %23 : vector<2x128xf32>
    %c0_16 = arith.constant 0 : index
    %c0_17 = arith.constant 0 : index
    %c0_18 = arith.constant 0 : index
    %25 = vector.load %arg2[%c0_16, %c0_17, %c0_18] : memref<1x2x16xf32, #tpu.memory_space<vmem>>, vector<1x2x16xf32>
    %26 = vector.shape_cast %25 : vector<1x2x16xf32> to vector<2x16xf32>
    %c0_19 = arith.constant 0 : index
    %c0_20 = arith.constant 0 : index
    %27 = vector.load %arg7[%c0_19, %c0_20] : memref<16x128xf32, #tpu.memory_space<vmem>>, vector<16x128xf32>
    %cst_21 = arith.constant dense<0.000000e+00> : vector<2x128xf32>
    %28 = tpu.matmul %26, %27, %cst_21 {dimension_numbers = #tpu.dot_dimension_numbers<[1], [0], [0], [1], [0, 0, 1, 1], [], []>} : vector<2x16xf32>, vector<16x128xf32>, vector<2x128xf32> -> vector<2x128xf32>
    %29 = arith.addf %18, %28 : vector<2x128xf32>
    %c0_22 = arith.constant 0 : index
    %c0_23 = arith.constant 0 : index
    %30 = vector.load %arg8[%c0_22, %c0_23] : memref<128x128xf32, #tpu.memory_space<vmem>>, vector<128x128xf32>
    %cst_24 = arith.constant dense<0.000000e+00> : vector<2x128xf32>
    %31 = tpu.matmul %3, %30, %cst_24 {dimension_numbers = #tpu.dot_dimension_numbers<[1], [0], [0], [1], [0, 0, 1, 1], [], []>} : vector<2x128xf32>, vector<128x128xf32>, vector<2x128xf32> -> vector<2x128xf32>
    %32 = arith.addf %29, %31 : vector<2x128xf32>
    %cst_25 = arith.constant dense<true> : vector<2x128xi1>
    %33 = arith.xori %24, %cst_25 : vector<2x128xi1>
    %34 = arith.andi %22, %33 : vector<2x128xi1>
    %cst_26 = arith.constant 0.000000e+00 : f32
    %35 = vector.broadcast %cst_26 : f32 to vector<2x128xf32>
    %36 = arith.select %22, %35, %15 : vector<2x128xi1>, vector<2x128xf32>
    %37 = arith.select %24, %4, %36 : vector<2x128xi1>, vector<2x128xf32>
    %38 = arith.extui %34 : vector<2x128xi1> to vector<2x128xi32>
    %39 = arith.sitofp %38 : vector<2x128xi32> to vector<2x128xf32>
    %40 = arith.extui %24 : vector<2x128xi1> to vector<2x128xi32>
    %41 = arith.sitofp %40 : vector<2x128xi32> to vector<2x128xf32>
    %42 = arith.subf %6, %41 : vector<2x128xf32>
    %cst_27 = arith.constant 0.000000e+00 : f32
    %43 = vector.broadcast %cst_27 : f32 to vector<2x128xf32>
    %44 = arith.maximumf %42, %43 : vector<2x128xf32>
    %cst_28 = arith.constant 5.000000e+00 : f32
    %45 = vector.broadcast %cst_28 : f32 to vector<2x128xf32>
    %46 = arith.select %34, %45, %44 : vector<2x128xi1>, vector<2x128xf32>
    %c0_29 = arith.constant 0 : index
    %c0_30 = arith.constant 0 : index
    %c0_31 = arith.constant 0 : index
    %47 = vector.load %arg10[%c0_29, %c0_30, %c0_31] : memref<1x2x128xf32, #tpu.memory_space<vmem>>, vector<1x2x128xf32>
    %48 = vector.shape_cast %47 : vector<1x2x128xf32> to vector<2x128xf32>
    %49 = vector.shape_cast %39 : vector<2x128xf32> to vector<1x2x128xf32>
    tpu.vector_store %arg10[%c0_29, %c0_30, %c0_31], %49 {strides = array<i32>} : memref<1x2x128xf32, #tpu.memory_space<vmem>>, vector<1x2x128xf32>,
    %c0_32 = arith.constant 0 : index
    %c0_33 = arith.constant 0 : index
    %50 = vector.load %arg11[%c0_32, %c0_33] : memref<2x128xf32, #tpu.memory_space<vmem>>, vector<2x128xf32>
    tpu.vector_store %arg11[%c0_32, %c0_33], %39 {strides = array<i32>} : memref<2x128xf32, #tpu.memory_space<vmem>>, vector<2x128xf32>,
    %c0_34 = arith.constant 0 : index
    %c0_35 = arith.constant 0 : index
    %51 = vector.load %arg12[%c0_34, %c0_35] : memref<2x128xf32, #tpu.memory_space<vmem>>, vector<2x128xf32>
    tpu.vector_store %arg12[%c0_34, %c0_35], %37 {strides = array<i32>} : memref<2x128xf32, #tpu.memory_space<vmem>>, vector<2x128xf32>,
    %c0_36 = arith.constant 0 : index
    %c0_37 = arith.constant 0 : index
    %52 = vector.load %arg13[%c0_36, %c0_37] : memref<2x128xf32, #tpu.memory_space<vmem>>, vector<2x128xf32>
    tpu.vector_store %arg13[%c0_36, %c0_37], %32 {strides = array<i32>} : memref<2x128xf32, #tpu.memory_space<vmem>>, vector<2x128xf32>,
    %c0_38 = arith.constant 0 : index
    %c0_39 = arith.constant 0 : index
    %53 = vector.load %arg14[%c0_38, %c0_39] : memref<2x128xf32, #tpu.memory_space<vmem>>, vector<2x128xf32>
    tpu.vector_store %arg14[%c0_38, %c0_39], %46 {strides = array<i32>} : memref<2x128xf32, #tpu.memory_space<vmem>>, vector<2x128xf32>,
    return
  }
  func.func @transform_0(%arg0: i32, %arg1: i32) -> (i32, i32, i32) {
    %c0_i32 = arith.constant 0 : i32
    %c0_i32_0 = arith.constant 0 : i32
    return %arg1, %arg0, %c0_i32 : i32, i32, i32
  }
  func.func @transform_1(%arg0: i32, %arg1: i32) -> (i32, i32) {
    %c0_i32 = arith.constant 0 : i32
    %c0_i32_0 = arith.constant 0 : i32
    return %arg0, %c0_i32 : i32, i32
  }
  func.func @transform_2(%arg0: i32, %arg1: i32) -> (i32, i32) {
    %c0_i32 = arith.constant 0 : i32
    %c0_i32_0 = arith.constant 0 : i32
    return %arg0, %c0_i32 : i32, i32
  }
  func.func @transform_3(%arg0: i32, %arg1: i32) -> (i32, i32) {
    %c0_i32 = arith.constant 0 : i32
    %c0_i32_0 = arith.constant 0 : i32
    return %arg0, %c0_i32 : i32, i32
  }
  func.func @transform_4(%arg0: i32, %arg1: i32) -> (i32, i32) {
    %c0_i32 = arith.constant 0 : i32
    %c0_i32_0 = arith.constant 0 : i32
    return %arg0, %c0_i32 : i32, i32
  }
  func.func @transform_5(%arg0: i32, %arg1: i32) -> (i32, i32) {
    %c0_i32 = arith.constant 0 : i32
    %c0_i32_0 = arith.constant 0 : i32
    %c0_i32_1 = arith.constant 0 : i32
    return %c0_i32, %c0_i32_0 : i32, i32
  }
  func.func @transform_6(%arg0: i32, %arg1: i32) -> (i32, i32) {
    %c0_i32 = arith.constant 0 : i32
    %c0_i32_0 = arith.constant 0 : i32
    %c0_i32_1 = arith.constant 0 : i32
    return %c0_i32, %c0_i32_0 : i32, i32
  }
  func.func @transform_7(%arg0: i32, %arg1: i32) -> (i32, i32) {
    %c0_i32 = arith.constant 0 : i32
    %c0_i32_0 = arith.constant 0 : i32
    %c0_i32_1 = arith.constant 0 : i32
    return %c0_i32, %c0_i32_0 : i32, i32
  }
  func.func @transform_8(%arg0: i32, %arg1: i32) -> (i32, i32, i32) {
    %c0_i32 = arith.constant 0 : i32
    %c0_i32_0 = arith.constant 0 : i32
    return %arg1, %arg0, %c0_i32 : i32, i32, i32
  }
  func.func @transform_9(%arg0: i32, %arg1: i32) -> (i32, i32) {
    %c0_i32 = arith.constant 0 : i32
    %c0_i32_0 = arith.constant 0 : i32
    return %arg0, %c0_i32 : i32, i32
  }
  func.func @transform_10(%arg0: i32, %arg1: i32) -> (i32, i32) {
    %c0_i32 = arith.constant 0 : i32
    %c0_i32_0 = arith.constant 0 : i32
    return %arg0, %c0_i32 : i32, i32
  }
  func.func @transform_11(%arg0: i32, %arg1: i32) -> (i32, i32) {
    %c0_i32 = arith.constant 0 : i32
    %c0_i32_0 = arith.constant 0 : i32
    return %arg0, %c0_i32 : i32, i32
  }
  func.func @transform_12(%arg0: i32, %arg1: i32) -> (i32, i32) {
    %c0_i32 = arith.constant 0 : i32
    %c0_i32_0 = arith.constant 0 : i32
    return %arg0, %c0_i32 : i32, i32
  }
}

</mosaic_0001>

<llo_original>
// kernel: lif_mc_refrac_sequence.1
$region0: #{lif_mc_refrac_sequence.1}
  #allocation0 [shape = 'u32[]', space=smem, size = 0x4, offset = 0x4, fixed_abs, tag = 'smem constant byte address 0x4 - core index']
  #allocation1 [shape = 'u32[72,128]{1,0:T(1,128)}', space=vmem, size = 0x9000, scoped, tag = 'internal scratch']
  %s0 = inlined_call_operand.vmem [shape: f32[1,2,16], index: 0, kind: input, shape index: {}]
  %s1 = inlined_call_operand.vmem [shape: f32[2,128], index: 1, kind: input, shape index: {}, may-alias: {1,9}]
  %s2 = inlined_call_operand.vmem [shape: f32[2,128], index: 2, kind: input, shape index: {}, may-alias: {2,10}]
  %s3 = inlined_call_operand.vmem [shape: f32[2,128], index: 3, kind: input, shape index: {}, may-alias: {3,11}]
  %s4 = inlined_call_operand.vmem [shape: f32[2,128], index: 4, kind: input, shape index: {}, may-alias: {4,12}]
  %s5 = inlined_call_operand.vmem [shape: f32[16,128], index: 5, kind: input, shape index: {}]
  %s6 = inlined_call_operand.hbm [shape: f32[128,128], index: 6, kind: input, shape index: {}]
  %s7 = inlined_call_operand.hbm [shape: f32[128,128], index: 7, kind: input, shape index: {}]
  %s8 = inlined_call_operand.hbm [shape: f32[1,2,128], index: 8, kind: output, shape index: {0}]
  %s9 = inlined_call_operand.vmem [shape: f32[2,128], index: 9, kind: output, shape index: {1}, may-alias: {1,9}]
  %s10 = inlined_call_operand.vmem [shape: f32[2,128], index: 10, kind: output, shape index: {2}, may-alias: {2,10}]
  %s11 = inlined_call_operand.vmem [shape: f32[2,128], index: 11, kind: output, shape index: {3}, may-alias: {3,11}]
  %s12 = inlined_call_operand.vmem [shape: f32[2,128], index: 12, kind: output, shape index: {4}, may-alias: {4,12}]
  %13 = xla_tuple %s8, %s9, %s10, %s11, %s12
  %s14 = sld [smem:[#allocation0]]
  $region86: #{lif_mc_refrac_sequence.1} parent=0
    _
  %s16 = ssub.s32 1, %s14
  %s17 = scalar_select 0, %s16, %s14
  $region1: #{lif_mc_refrac_sequence.1} parent=0
    #allocation2 [shape = 'u8[65536]{0}', space=vmem, size = 0x10000, scoped, tag = 'input window, operand 6, single buffered']
    #allocation3 [shape = 's32[1]{0}', space=sflag, size = 0x4, scoped, tag = 'scoped memory for lif_mc_refrac_sequence.1']
    #allocation4 [shape = 's32[1]{0}', space=sflag, size = 0x4, scoped, tag = 'scoped memory for lif_mc_refrac_sequence.1']
    #allocation5 [shape = 'u8[65536]{0}', space=vmem, size = 0x10000, scoped, tag = 'input window, operand 7, single buffered']
    #allocation6 [shape = 's32[1]{0}', space=sflag, size = 0x4, scoped, tag = 'scoped memory for lif_mc_refrac_sequence.1']
    #allocation7 [shape = 'u8[1024]{0}', space=vmem, size = 0x400, scoped, tag = 'output window, operand 0, single buffered']
    %18 = vsyncpa [#allocation3], 0
    %19 = vsyncpa [#allocation6], 0
    %20 = vsyncpa [#allocation4], 0
    // Predicated region
    $region2: #{lif_mc_refrac_sequence.1} parent=1 // pred_check
      _
    $region3: #{lif_mc_refrac_sequence.1} parent=1 // pred_check_branch
      %22 = sbr.rel (0) target = $region5
    $region4: #{lif_mc_refrac_sequence.1} parent=1 // pred_region
      _
    $region5: #{lif_mc_refrac_sequence.1} parent=1 // pred_fallthru
      _
    // Predicated region
    $region6: #{lif_mc_refrac_sequence.1} parent=1 // pred_check
      _
    $region7: #{lif_mc_refrac_sequence.1} parent=1 // pred_check_branch
      %24 = sbr.rel (0) target = $region9
    $region8: #{lif_mc_refrac_sequence.1} parent=1 // pred_region
      _
    $region9: #{lif_mc_refrac_sequence.1} parent=1 // pred_fallthru
      _
    // Predicated region
    $region10: #{lif_mc_refrac_sequence.1} parent=1 // pred_check
      _
    $region11: #{lif_mc_refrac_sequence.1} parent=1 // pred_check_branch
      %26 = sbr.rel (0) target = $region13
    $region12: #{lif_mc_refrac_sequence.1} parent=1 // pred_region
      _
    $region13: #{lif_mc_refrac_sequence.1} parent=1 // pred_fallthru
      _
    // Predicated region
    $region14: #{lif_mc_refrac_sequence.1} parent=1 // pred_check
      _
    $region15: #{lif_mc_refrac_sequence.1} parent=1 // pred_check_branch
      %28 = sbr.rel (0) target = $region17
    $region16: #{lif_mc_refrac_sequence.1} parent=1 // pred_region
      _
    $region17: #{lif_mc_refrac_sequence.1} parent=1 // pred_fallthru
      _
    // Predicated region
    $region18: #{lif_mc_refrac_sequence.1} parent=1 // pred_check
      _
    $region19: #{lif_mc_refrac_sequence.1} parent=1 // pred_check_branch
      %30 = sbr.rel (0) target = $region21
    $region20: #{lif_mc_refrac_sequence.1} parent=1 // pred_region
      _
    $region21: #{lif_mc_refrac_sequence.1} parent=1 // pred_fallthru
      _
    // Predicated region
    $region22: #{lif_mc_refrac_sequence.1} parent=1 // pred_check
      _
    $region23: #{lif_mc_refrac_sequence.1} parent=1 // pred_check_branch
      %32 = sbr.rel (0) target = $region25
    $region24: #{lif_mc_refrac_sequence.1} parent=1 // pred_region
      _
    $region25: #{lif_mc_refrac_sequence.1} parent=1 // pred_fallthru
      _
    // Predicated region
    $region26: #{lif_mc_refrac_sequence.1} parent=1 // pred_check
      _
    $region27: #{lif_mc_refrac_sequence.1} parent=1 // pred_check_branch
      %34 = sbr.rel (0) target = $region29
    $region28: #{lif_mc_refrac_sequence.1} parent=1 // pred_region
      %36 = vsyncadd [#allocation3], 0
      %s37 = sshll.u32 %s6, 4
      %s38 = int_to_ptr.hbm [resolvable:$true] %s37
      %s39 = sshll.u32 [#allocation2], 4
      %s40 = int_to_ptr.vmem [resolvable:$true] %s39
      %45 = dma.hbm_to_vmem [thread:$0]  %s38, 2048, %s40, [#allocation3], 128, 128, 8
    $region29: #{lif_mc_refrac_sequence.1} parent=1 // pred_fallthru
      _
    // Predicated region
    $region30: #{lif_mc_refrac_sequence.1} parent=1 // pred_check
      _
    $region31: #{lif_mc_refrac_sequence.1} parent=1 // pred_check_branch
      %47 = sbr.rel (0) target = $region33
    $region32: #{lif_mc_refrac_sequence.1} parent=1 // pred_region
      %49 = vsyncadd [#allocation6], 0
      %s50 = sshll.u32 %s7, 4
      %s51 = int_to_ptr.hbm [resolvable:$true] %s50
      %s52 = sshll.u32 [#allocation5], 4
      %s53 = int_to_ptr.vmem [resolvable:$true] %s52
      %58 = dma.hbm_to_vmem [thread:$0]  %s51, 2048, %s53, [#allocation6], 128, 128, 8
    $region33: #{lif_mc_refrac_sequence.1} parent=1 // pred_fallthru
      _
    // Predicated region
    $region34: #{lif_mc_refrac_sequence.1} parent=1 // pred_check
      _
    $region35: #{lif_mc_refrac_sequence.1} parent=1 // pred_check_branch
      %60 = sbr.rel (0) target = $region37
    $region36: #{lif_mc_refrac_sequence.1} parent=1 // pred_region
      %62 = dma.done [#allocation3], 2048
    $region37: #{lif_mc_refrac_sequence.1} parent=1 // pred_fallthru
      _
    // Predicated region
    $region38: #{lif_mc_refrac_sequence.1} parent=1 // pred_check
      _
    $region39: #{lif_mc_refrac_sequence.1} parent=1 // pred_check_branch
      %64 = sbr.rel (0) target = $region41
    $region40: #{lif_mc_refrac_sequence.1} parent=1 // pred_region
      %66 = dma.done [#allocation6], 2048
    $region41: #{lif_mc_refrac_sequence.1} parent=1 // pred_fallthru
      _
    %p67 = scmp.eq.s32.totalorder 0, 0
    // Predicated region
    $region42: #{lif_mc_refrac_sequence.1} parent=1 // pred_check
      %p68 = pneg %p67
    $region43: #{lif_mc_refrac_sequence.1} parent=1 // pred_check_branch
      %70 = sbr.rel (%p68) target = $region45
    $region44: #{lif_mc_refrac_sequence.1} parent=1 // pred_region
      %v71 = vld [vmem:[%s1] sm:$0x3]
      %72 = vst [vmem:[%s9] sm:$0x3] %v71
      %v73 = vld [vmem:[%s2] sm:$0x3]
      %74 = vst [vmem:[%s10] sm:$0x3] %v73
      %v75 = vld [vmem:[%s3] sm:$0x3]
      %76 = vst [vmem:[%s11] sm:$0x3] %v75
      %v77 = vld [vmem:[%s4] sm:$0x3]
      %78 = vst [vmem:[%s12] sm:$0x3] %v77
    $region45: #{lif_mc_refrac_sequence.1} parent=1 // pred_fallthru
      _
    %v79 = vld [vmem:[%s9] sm:$0x3]
    %v80 = vld [vmem:[%s10] sm:$0x3]
    %v81 = vld [vmem:[%s11] sm:$0x3]
    %v82 = vld [vmem:[%s12] sm:$0x3]
    %v83 = vld [vmem:[#allocation5] sm:$0xff]
    %v84 = vld [vmem:[#allocation5 + $0x8] sm:$0xff]
    %v85 = vld [vmem:[#allocation5 + $0x10] sm:$0xff]
    %v86 = vld [vmem:[#allocation5 + $0x18] sm:$0xff]
    %v87 = vld [vmem:[#allocation5 + $0x20] sm:$0xff]
    %v88 = vld [vmem:[#allocation5 + $0x28] sm:$0xff]
    %v89 = vld [vmem:[#allocation5 + $0x30] sm:$0xff]
    %v90 = vld [vmem:[#allocation5 + $0x38] sm:$0xff]
    %v91 = vld [vmem:[#allocation5 + $0x40] sm:$0xff]
    %v92 = vld [vmem:[#allocation5 + $0x48] sm:$0xff]
    %v93 = vld [vmem:[#allocation5 + $0x50] sm:$0xff]
    %v94 = vld [vmem:[#allocation5 + $0x58] sm:$0xff]
    %v95 = vld [vmem:[#allocation5 + $0x60] sm:$0xff]
    %v96 = vld [vmem:[#allocation5 + $0x68] sm:$0xff]
    %v97 = vld [vmem:[#allocation5 + $0x70] sm:$0xff]
    %v98 = vld [vmem:[#allocation5 + $0x78] sm:$0xff]
    %99 = vmatpush.msra.mxu0 %v98
    %100 = vmatpush.msra.mxu0 %v97
    %101 = vmatpush.msra.mxu0 %v96
    %102 = vmatpush.msra.mxu0 %v95
    %103 = vmatpush.msra.mxu0 %v94
    %104 = vmatpush.msra.mxu0 %v93
    %105 = vmatpush.msra.mxu0 %v92
    %106 = vmatpush.msra.mxu0 %v91
    %107 = vmatpush.msra.mxu0 %v90
    %108 = vmatpush.msra.mxu0 %v89
    %109 = vmatpush.msra.mxu0 %v88
    %110 = vmatpush.msra.mxu0 %v87
    %111 = vmatpush.msra.mxu0 %v86
    %112 = vmatpush.msra.mxu0 %v85
    %113 = vmatpush.msra.mxu0 %v84
    %114 = vmatpush.msra.mxu0 %v83
    %115 = vmatmul.f32.gmra.mxu0 %v80
    %v116 = vpop.f32.mrf.mxu0
    %v117 = vadd.f32 0.0, %v116
    %118 = vdwg.mxu0
    %v119 = vsub.f32 0.0, %v80
    %v120 = vadd.f32 %v119, %v81
    %v121 = vmul.f32 %v120, 0.1
    %v122 = vadd.f32 %v121, %v117
    %v123 = vadd.f32 %v80, %v122
    %v124 = vmul.f32 %v81, 0.2
    %v125 = vsub.f32 %v81, %v124
    %v126 = vsub.f32 %v123, 1.0
    %vm127 = vcmp.gt.f32.partialorder %v126, 0.0
    %vm128 = vcmp.gt.f32.partialorder %v82, 0.0
    %v129 = vld [vmem:[%s0] sm:$0x3]
    %v130 = vld [vmem:[%s5] sm:$0xff]
    %v131 = vld [vmem:[%s5 + $0x8] sm:$0xff]
    %vm132 = vcmask 130048
    %v134 = vsel %vm132, %v129, 0
    %136 = vmatpush.msra.mxu0 0.0
    %137 = vmatpush.msra.mxu0 0.0
    %138 = vmatpush.msra.mxu0 0.0
    %139 = vmatpush.msra.mxu0 0.0
    %140 = vmatpush.msra.mxu0 0.0
    %141 = vmatpush.msra.mxu0 0.0
    %142 = vmatpush.msra.mxu0 0.0
    %143 = vmatpush.msra.mxu0 0.0
    %144 = vmatpush.msra.mxu0 0.0
    %145 = vmatpush.msra.mxu0 0.0
    %146 = vmatpush.msra.mxu0 0.0
    %147 = vmatpush.msra.mxu0 0.0
    %148 = vmatpush.msra.mxu0 0.0
    %149 = vmatpush.msra.mxu0 0.0
    %150 = vmatpush.msra.mxu0 %v131
    %151 = vmatpush.msra.mxu0 %v130
    %152 = vmatmul.f32.gmra.mxu0 %v134
    %v153 = vpop.f32.mrf.mxu0
    %v154 = vadd.f32 0.0, %v153
    %155 = vdwg.mxu0
    %v156 = vadd.f32 %v125, %v154
    %v157 = vld [vmem:[#allocation2] sm:$0xff]
    %v158 = vld [vmem:[#allocation2 + $0x8] sm:$0xff]
    %v159 = vld [vmem:[#allocation2 + $0x10] sm:$0xff]
    %v160 = vld [vmem:[#allocation2 + $0x18] sm:$0xff]
    %v161 = vld [vmem:[#allocation2 + $0x20] sm:$0xff]
    %v162 = vld [vmem:[#allocation2 + $0x28] sm:$0xff]
    %v163 = vld [vmem:[#allocation2 + $0x30] sm:$0xff]
    %v164 = vld [vmem:[#allocation2 + $0x38] sm:$0xff]
    %v165 = vld [vmem:[#allocation2 + $0x40] sm:$0xff]
    %v166 = vld [vmem:[#allocation2 + $0x48] sm:$0xff]
    %v167 = vld [vmem:[#allocation2 + $0x50] sm:$0xff]
    %v168 = vld [vmem:[#allocation2 + $0x58] sm:$0xff]
    %v169 = vld [vmem:[#allocation2 + $0x60] sm:$0xff]
    %v170 = vld [vmem:[#allocation2 + $0x68] sm:$0xff]
    %v171 = vld [vmem:[#allocation2 + $0x70] sm:$0xff]
    %v172 = vld [vmem:[#allocation2 + $0x78] sm:$0xff]
    %173 = vmatpush.msra.mxu0 %v172
    %174 = vmatpush.msra.mxu0 %v171
    %175 = vmatpush.msra.mxu0 %v170
    %176 = vmatpush.msra.mxu0 %v169
    %177 = vmatpush.msra.mxu0 %v168
    %178 = vmatpush.msra.mxu0 %v167
    %179 = vmatpush.msra.mxu0 %v166
    %180 = vmatpush.msra.mxu0 %v165
    %181 = vmatpush.msra.mxu0 %v164
    %182 = vmatpush.msra.mxu0 %v163
    %183 = vmatpush.msra.mxu0 %v162
    %184 = vmatpush.msra.mxu0 %v161
    %185 = vmatpush.msra.mxu0 %v160
    %186 = vmatpush.msra.mxu0 %v159
    %187 = vmatpush.msra.mxu0 %v158
    %188 = vmatpush.msra.mxu0 %v157
    %189 = vmatmul.f32.gmra.mxu0 %v79
    %v190 = vpop.f32.mrf.mxu0
    %v191 = vadd.f32 0.0, %v190
    %192 = vdwg.mxu0
    %v193 = vadd.f32 %v156, %v191
    %vm194 = vmxor %vm128, 1
    %vm195 = vmand %vm127, %vm194
    %v196 = vsel %vm127, 0.0, %v123
    %v197 = vsel %vm128, %v80, %v196
    %v198 = vsel %vm195, 1, 0
    %v199 = vcvt.s32.f32 %v198
    %v200 = vsel %vm128, 1, 0
    %v201 = vcvt.s32.f32 %v200
    %v202 = vsub.f32 %v82, %v201
    %v203 = vmax.f32 %v202, 0.0
    %v204 = vsel %vm195, 5.0, %v203
    %205 = vst [vmem:[#allocation7] sm:$0x3] %v199
    %206 = vst [vmem:[%s9] sm:$0x3] %v199
    %207 = vst [vmem:[%s10] sm:$0x3] %v197
    %208 = vst [vmem:[%s11] sm:$0x3] %v193
    %209 = vst [vmem:[%s12] sm:$0x3] %v204
    // Predicated region
    $region46: #{lif_mc_refrac_sequence.1} parent=1 // pred_check
      _
    $region47: #{lif_mc_refrac_sequence.1} parent=1 // pred_check_branch
      %211 = sbr.rel (0) target = $region49
    $region48: #{lif_mc_refrac_sequence.1} parent=1 // pred_region
      %213 = vsyncadd [#allocation4], 0
      %s215 = sshll.u32 [#allocation7], 4
      %s216 = int_to_ptr.vmem [resolvable:$true] %s215
      %s217 = sshll.u32 %s8, 4
      %s218 = int_to_ptr.hbm [resolvable:$true] %s217
      %220 = dma.vmem_to_hbm [thread:$0]  %s216, 32, %s218, [#allocation4]
    $region49: #{lif_mc_refrac_sequence.1} parent=1 // pred_fallthru
      _
    // Predicated region
    $region50: #{lif_mc_refrac_sequence.1} parent=1 // pred_check
      _
    $region51: #{lif_mc_refrac_sequence.1} parent=1 // pred_check_branch
      %222 = sbr.rel (0) target = $region53
    $region52: #{lif_mc_refrac_sequence.1} parent=1 // pred_region
      _
    $region53: #{lif_mc_refrac_sequence.1} parent=1 // pred_fallthru
      _
    // Predicated region
    $region54: #{lif_mc_refrac_sequence.1} parent=1 // pred_check
      _
    $region55: #{lif_mc_refrac_sequence.1} parent=1 // pred_check_branch
      %224 = sbr.rel (0) target = $region57
    $region56: #{lif_mc_refrac_sequence.1} parent=1 // pred_region
      _
    $region57: #{lif_mc_refrac_sequence.1} parent=1 // pred_fallthru
      _
    // Predicated region
    $region58: #{lif_mc_refrac_sequence.1} parent=1 // pred_check
      _
    $region59: #{lif_mc_refrac_sequence.1} parent=1 // pred_check_branch
      %226 = sbr.rel (0) target = $region61
    $region60: #{lif_mc_refrac_sequence.1} parent=1 // pred_region
      _
    $region61: #{lif_mc_refrac_sequence.1} parent=1 // pred_fallthru
      _
    // Predicated region
    $region62: #{lif_mc_refrac_sequence.1} parent=1 // pred_check
      _
    $region63: #{lif_mc_refrac_sequence.1} parent=1 // pred_check_branch
      %228 = sbr.rel (0) target = $region65
    $region64: #{lif_mc_refrac_sequence.1} parent=1 // pred_region
      _
    $region65: #{lif_mc_refrac_sequence.1} parent=1 // pred_fallthru
      _
    // Predicated region
    $region66: #{lif_mc_refrac_sequence.1} parent=1 // pred_check
      _
    $region67: #{lif_mc_refrac_sequence.1} parent=1 // pred_check_branch
      %230 = sbr.rel (0) target = $region69
    $region68: #{lif_mc_refrac_sequence.1} parent=1 // pred_region
      %232 = dma.done [#allocation4], 32
    $region69: #{lif_mc_refrac_sequence.1} parent=1 // pred_fallthru
      _
    // Predicated region
    $region70: #{lif_mc_refrac_sequence.1} parent=1 // pred_check
      _
    $region71: #{lif_mc_refrac_sequence.1} parent=1 // pred_check_branch
      %234 = sbr.rel (0) target = $region73
    $region72: #{lif_mc_refrac_sequence.1} parent=1 // pred_region
      _
    $region73: #{lif_mc_refrac_sequence.1} parent=1 // pred_fallthru
      _
    // Predicated region
    $region74: #{lif_mc_refrac_sequence.1} parent=1 // pred_check
      _
    $region75: #{lif_mc_refrac_sequence.1} parent=1 // pred_check_branch
      %236 = sbr.rel (0) target = $region77
    $region76: #{lif_mc_refrac_sequence.1} parent=1 // pred_region
      _
    $region77: #{lif_mc_refrac_sequence.1} parent=1 // pred_fallthru
      _
    // Predicated region
    $region78: #{lif_mc_refrac_sequence.1} parent=1 // pred_check
      _
    $region79: #{lif_mc_refrac_sequence.1} parent=1 // pred_check_branch
      %238 = sbr.rel (0) target = $region81
    $region80: #{lif_mc_refrac_sequence.1} parent=1 // pred_region
      _
    $region81: #{lif_mc_refrac_sequence.1} parent=1 // pred_fallthru
      _
    // Predicated region
    $region82: #{lif_mc_refrac_sequence.1} parent=1 // pred_check
      _
    $region83: #{lif_mc_refrac_sequence.1} parent=1 // pred_check_branch
      %240 = sbr.rel (0) target = $region85
    $region84: #{lif_mc_refrac_sequence.1} parent=1 // pred_region
      _
    $region85: #{lif_mc_refrac_sequence.1} parent=1 // pred_fallthru
      _
    %241 = vsyncpa [#allocation3], 1
    %242 = vsyncpa [#allocation6], 1
    %243 = vsyncpa [#allocation4], 1

</llo_original>
